<compile_context>
chip_gen: v6e
topology: v6e:2x2x1
jax: 0.10.0
libtpu: 0.0.40
codegen_flags: <defaults>
</compile_context>

<pallas_src>
import functools

import jax
import jax.numpy as jnp
from jax.experimental import pallas as pl
from jax.experimental.pallas import tpu as pltpu


def _prenorm_conv1x1_kernel(x_ref, g_ref, b_ref, w_ref, wb_ref, o_ref, *, eps):
    # x_ref: (1, C, T) tile -- channels on sublanes, spatial tile on lanes.
    x = x_ref[0].astype(jnp.float32)                      # (C, T)

    # Channel LayerNorm: per-pixel (per-lane) reduction over the sublane axis.
    mean = jnp.mean(x, axis=0, keepdims=True)             # (1, T)
    xc = x - mean
    var = jnp.mean(xc * xc, axis=0, keepdims=True)        # (1, T)
    # (x - mean) / (sqrt(var) + eps)  ==  (x - mean) * 1/(std + eps)
    # Precise reciprocal on the (1, T) row (keeps 1e-5 accuracy vs reference).
    inv = pl.reciprocal(jnp.sqrt(var) + eps, approx=False)
    y = xc * inv * g_ref[...] + b_ref[...]                # g, b: (C, 1)

    # fn = 1x1 Conv2d(dim, dim): out = W @ y + bias  (RHS already lane-major,
    # no weight transpose inside the kernel).
    out = jnp.dot(w_ref[...], y, preferred_element_type=jnp.float32) + wb_ref[...]
    o_ref[0] = out.astype(o_ref.dtype)


def _pick_tile_cols(hw, c, budget_bytes=8 << 20):
    """Largest lane tile (multiple of 128) whose f32 block fits the budget."""
    max_cols = max(128, (budget_bytes // (c * 4)) // 128 * 128)
    if hw <= max_cols:
        return hw            # full spatial extent is always a legal block shape
    return max_cols


def prenorm_conv1x1(x_nchw, g, b, w, wb, *, eps=1e-5, tile_cols=None):
    """PreNorm(dim, Conv2d(dim, dim, 1)) forward.

    x_nchw: (N, C, H, W). g, b: (C,). w: (C_out, C_in). wb: (C_out,).
    """
    N, C, H, W = x_nchw.shape
    HW = H * W

    # Pure reshape (row-major contiguous) -- no transpose, no extra HBM pass.
    x3 = x_nchw.reshape(N, C, HW)

    if tile_cols is None:
        tile_cols = _pick_tile_cols(HW, C)
    grid = (N, pl.cdiv(HW, tile_cols))

    g2 = g.reshape(C, 1).astype(jnp.float32)
    b2 = b.reshape(C, 1).astype(jnp.float32)
    wb2 = wb.reshape(C, 1).astype(jnp.float32)
    w2 = w.astype(jnp.float32)   # (C_out, C_in), used directly as dot LHS

    # VMEM budget: double-buffered in/out tiles + (double-buffered) params.
    # Capped at 56 MiB so it also fits v7x's 64 MiB physical VMEM.
    blk_bytes = tile_cols * C * 4
    param_bytes = (C * C + 3 * C) * 4
    vmem_need = 4 * blk_bytes + 2 * param_bytes + (2 << 20)
    vmem_limit = int(min(max(vmem_need, 32 * 1024 * 1024), 56 * 1024 * 1024))
    # TODO(synk): for very large C on v7x, single-buffer the resident weight
    # (pl.Buffered) or stage it in VMEM scratch to reclaim the extra buffer.

    out3 = pl.pallas_call(
        functools.partial(_prenorm_conv1x1_kernel, eps=eps),
        out_shape=jax.ShapeDtypeStruct((N, C, HW), x_nchw.dtype),
        grid_spec=pltpu.PrefetchScalarGridSpec(
            num_scalar_prefetch=0,
            grid=grid,
            in_specs=[
                pl.BlockSpec((1, C, tile_cols), lambda n, j: (n, 0, j)),  # x tile
                pl.BlockSpec((C, 1), lambda n, j: (0, 0)),                # g
                pl.BlockSpec((C, 1), lambda n, j: (0, 0)),                # b
                pl.BlockSpec((C, C), lambda n, j: (0, 0)),                # conv weight
                pl.BlockSpec((C, 1), lambda n, j: (0, 0)),                # conv bias
            ],
            out_specs=pl.BlockSpec((1, C, tile_cols), lambda n, j: (n, 0, j)),
        ),
        compiler_params=pltpu.CompilerParams(
            dimension_semantics=("parallel", "parallel"),
            vmem_limit_bytes=vmem_limit),
    )(x3, g2, b2, w2, wb2)

    # Pure reshape back to NCHW -- no transpose.
    return out3.reshape(N, C, H, W)


def _reference(x_nchw, g, b, w, wb, eps=1e-5):
    # Pure-JAX reference mirroring the PyTorch module exactly.
    mean = jnp.mean(x_nchw, axis=1, keepdims=True)
    var = jnp.mean((x_nchw - mean) ** 2, axis=1, keepdims=True)
    std = jnp.sqrt(var)
    y = (x_nchw - mean) / (std + eps) * g.reshape(1, -1, 1, 1) + b.reshape(1, -1, 1, 1)
    out = jnp.einsum('nchw,oc->nohw', y, w) + wb.reshape(1, -1, 1, 1)
    return out


if __name__ == "__main__":
    key = jax.random.PRNGKey(0)
    N, C, H, W = 2, 4, 16, 16
    k1, k2, k3 = jax.random.split(key, 3)

    x = jax.random.normal(k1, (N, C, H, W), dtype=jnp.float32)

    # LayerNorm params (torch init: g=ones, b=zeros) -- perturbed deterministically
    # so the affine path is exercised.
    g = jnp.ones((C,), jnp.float32) + 0.1 * jnp.arange(C, dtype=jnp.float32)
    b = 0.01 * jnp.arange(C, dtype=jnp.float32)

    # fn = Conv2d(C, C, kernel_size=1) deterministic weights
    w = jax.random.normal(k2, (C, C), dtype=jnp.float32) * 0.1
    wb = jax.random.normal(k3, (C,), dtype=jnp.float32) * 0.1

    out = prenorm_conv1x1(x, g, b, w, wb)
    out = jax.block_until_ready(out)

    ref = _reference(x, g, b, w, wb)
    assert out.shape == (N, C, H, W)
    assert jnp.allclose(out, ref, atol=1e-5, rtol=1e-5), "mismatch vs reference"

    print("KERNEL_OK")
</pallas_src>

<mosaic_0001>
module attributes {stable_mosaic.version = 11 : i64} {
  func.func @_prenorm_conv1x1_kernel(%arg0: i32, %arg1: i32, %arg2: memref<1x4x256xf32, #tpu.memory_space<vmem>>, %arg3: memref<4x1xf32, #tpu.memory_space<vmem>>, %arg4: memref<4x1xf32, #tpu.memory_space<vmem>>, %arg5: memref<4x4xf32, #tpu.memory_space<vmem>>, %arg6: memref<4x1xf32, #tpu.memory_space<vmem>>, %arg7: memref<1x4x256xf32, #tpu.memory_space<vmem>>) attributes {dimension_semantics = [#tpu.dimension_semantics<parallel>, #tpu.dimension_semantics<parallel>], iteration_bounds = array<i64: 2, 1>, scalar_prefetch = 0 : i64, scratch_operands = 0 : i64, tpu.core_type = #tpu.core_type<tc>, window_params = [{transform_indices = @transform_0, window_bounds = array<i64: 1, 4, 256>}, {pipeline_mode = #tpu.pipeline_mode<synchronous>, transform_indices = @transform_1, window_bounds = array<i64: 4, 1>}, {pipeline_mode = #tpu.pipeline_mode<synchronous>, transform_indices = @transform_2, window_bounds = array<i64: 4, 1>}, {pipeline_mode = #tpu.pipeline_mode<synchronous>, transform_indices = @transform_3, window_bounds = array<i64: 4, 4>}, {pipeline_mode = #tpu.pipeline_mode<synchronous>, transform_indices = @transform_4, window_bounds = array<i64: 4, 1>}, {transform_indices = @transform_5, window_bounds = array<i64: 1, 4, 256>}]} {
    %c0 = arith.constant 0 : index
    %c0_0 = arith.constant 0 : index
    %c0_1 = arith.constant 0 : index
    %0 = vector.load %arg2[%c0, %c0_0, %c0_1] : memref<1x4x256xf32, #tpu.memory_space<vmem>>, vector<1x4x256xf32>
    %1 = vector.shape_cast %0 : vector<1x4x256xf32> to vector<4x256xf32>
    %cst = arith.constant dense<0.000000e+00> : vector<256xf32>
    %2 = vector.multi_reduction <add>, %1, %cst [0] : vector<4x256xf32> to vector<256xf32>
    %3 = vector.shape_cast %2 : vector<256xf32> to vector<1x256xf32>
    %cst_2 = arith.constant 4.000000e+00 : f32
    %4 = vector.broadcast %cst_2 : f32 to vector<1x256xf32>
    %5 = arith.divf %3, %4 : vector<1x256xf32>
    %6 = vector.broadcast %5 : vector<1x256xf32> to vector<4x256xf32>
    %7 = arith.subf %1, %6 : vector<4x256xf32>
    %8 = arith.mulf %7, %7 : vector<4x256xf32>
    %cst_3 = arith.constant dense<0.000000e+00> : vector<256xf32>
    %9 = vector.multi_reduction <add>, %8, %cst_3 [0] : vector<4x256xf32> to vector<256xf32>
    %10 = vector.shape_cast %9 : vector<256xf32> to vector<1x256xf32>
    %cst_4 = arith.constant 4.000000e+00 : f32
    %11 = vector.broadcast %cst_4 : f32 to vector<1x256xf32>
    %12 = arith.divf %10, %11 : vector<1x256xf32>
    %13 = math.sqrt %12 : vector<1x256xf32>
    %cst_5 = arith.constant 9.99999974E-6 : f32
    %14 = vector.broadcast %cst_5 : f32 to vector<1x256xf32>
    %15 = arith.addf %13, %14 : vector<1x256xf32>
    %16 = tpu.reciprocal %15 : vector<1x256xf32> -> vector<1x256xf32>
    %17 = vector.broadcast %16 : vector<1x256xf32> to vector<4x256xf32>
    %18 = arith.mulf %7, %17 : vector<4x256xf32>
    %c0_6 = arith.constant 0 : index
    %c0_7 = arith.constant 0 : index
    %19 = vector.load %arg3[%c0_6, %c0_7] : memref<4x1xf32, #tpu.memory_space<vmem>>, vector<4x1xf32>
    %20 = vector.broadcast %19 : vector<4x1xf32> to vector<4x256xf32>
    %21 = arith.mulf %18, %20 : vector<4x256xf32>
    %c0_8 = arith.constant 0 : index
    %c0_9 = arith.constant 0 : index
    %22 = vector.load %arg4[%c0_8, %c0_9] : memref<4x1xf32, #tpu.memory_space<vmem>>, vector<4x1xf32>
    %23 = vector.broadcast %22 : vector<4x1xf32> to vector<4x256xf32>
    %24 = arith.addf %21, %23 : vector<4x256xf32>
    %c0_10 = arith.constant 0 : index
    %c0_11 = arith.constant 0 : index
    %25 = vector.load %arg5[%c0_10, %c0_11] : memref<4x4xf32, #tpu.memory_space<vmem>>, vector<4x4xf32>
    %cst_12 = arith.constant dense<0.000000e+00> : vector<4x256xf32>
    %26 = tpu.matmul %25, %24, %cst_12 {dimension_numbers = #tpu.dot_dimension_numbers<[1], [0], [0], [1], [0, 0, 1, 1], [], []>} : vector<4x4xf32>, vector<4x256xf32>, vector<4x256xf32> -> vector<4x256xf32>
    %c0_13 = arith.constant 0 : index
    %c0_14 = arith.constant 0 : index
    %27 = vector.load %arg6[%c0_13, %c0_14] : memref<4x1xf32, #tpu.memory_space<vmem>>, vector<4x1xf32>
    %28 = vector.broadcast %27 : vector<4x1xf32> to vector<4x256xf32>
    %29 = arith.addf %26, %28 : vector<4x256xf32>
    %c0_15 = arith.constant 0 : index
    %c0_16 = arith.constant 0 : index
    %c0_17 = arith.constant 0 : index
    %30 = vector.load %arg7[%c0_15, %c0_16, %c0_17] : memref<1x4x256xf32, #tpu.memory_space<vmem>>, vector<1x4x256xf32>
    %31 = vector.shape_cast %30 : vector<1x4x256xf32> to vector<4x256xf32>
    %32 = vector.shape_cast %29 : vector<4x256xf32> to vector<1x4x256xf32>
    tpu.vector_store %arg7[%c0_15, %c0_16, %c0_17], %32 {strides = array<i32>} : memref<1x4x256xf32, #tpu.memory_space<vmem>>, vector<1x4x256xf32>,
    return
  }
  func.func @transform_0(%arg0: i32, %arg1: i32) -> (i32, i32, i32) {
    %c0_i32 = arith.constant 0 : i32
    %c0_i32_0 = arith.constant 0 : i32
    return %arg0, %c0_i32, %arg1 : i32, i32, i32
  }
  func.func @transform_1(%arg0: i32, %arg1: i32) -> (i32, i32) {
    %c0_i32 = arith.constant 0 : i32
    %c0_i32_0 = arith.constant 0 : i32
    %c0_i32_1 = arith.constant 0 : i32
    return %c0_i32, %c0_i32_0 : i32, i32
  }
  func.func @transform_2(%arg0: i32, %arg1: i32) -> (i32, i32) {
    %c0_i32 = arith.constant 0 : i32
    %c0_i32_0 = arith.constant 0 : i32
    %c0_i32_1 = arith.constant 0 : i32
    return %c0_i32, %c0_i32_0 : i32, i32
  }
  func.func @transform_3(%arg0: i32, %arg1: i32) -> (i32, i32) {
    %c0_i32 = arith.constant 0 : i32
    %c0_i32_0 = arith.constant 0 : i32
    %c0_i32_1 = arith.constant 0 : i32
    return %c0_i32, %c0_i32_0 : i32, i32
  }
  func.func @transform_4(%arg0: i32, %arg1: i32) -> (i32, i32) {
    %c0_i32 = arith.constant 0 : i32
    %c0_i32_0 = arith.constant 0 : i32
    %c0_i32_1 = arith.constant 0 : i32
    return %c0_i32, %c0_i32_0 : i32, i32
  }
  func.func @transform_5(%arg0: i32, %arg1: i32) -> (i32, i32, i32) {
    %c0_i32 = arith.constant 0 : i32
    %c0_i32_0 = arith.constant 0 : i32
    return %arg0, %c0_i32, %arg1 : i32, i32, i32
  }
}

</mosaic_0001>

<llo_original>
// kernel: tpu_custom_call.1
$region0: #{tpu_custom_call.1}
  #allocation0 [shape = 'u32[]', space=smem, size = 0x4, offset = 0x4, fixed_abs, tag = 'smem constant byte address 0x4 - core index']
  #allocation1 [shape = 'u32[144,128]{1,0:T(1,128)}', space=vmem, size = 0x12000, scoped, tag = 'internal scratch']
  %s0 = inlined_call_operand.hbm [shape: f32[2,4,256], index: 0, kind: input, shape index: {}]
  %s1 = inlined_call_operand.vmem [shape: f32[4,1], index: 1, kind: input, shape index: {}]
  %s2 = inlined_call_operand.vmem [shape: f32[4,1], index: 2, kind: input, shape index: {}]
  %s3 = inlined_call_operand.vmem [shape: f32[4,4], index: 3, kind: input, shape index: {}]
  %s4 = inlined_call_operand.vmem [shape: f32[4,1], index: 4, kind: input, shape index: {}]
  %s5 = inlined_call_operand.hbm [shape: f32[2,4,256], index: 5, kind: output, shape index: {}]
  %s6 = sld [smem:[#allocation0]]
  $region57: #{tpu_custom_call.1} parent=0
    _
  %s8 = ssub.s32 1, %s6
  %s9 = scalar_select 0, %s8, %s6
  $region1: #{tpu_custom_call.1} parent=0
    #allocation2 [shape = 'u8[8192]{0}', space=vmem, size = 0x2000, scoped, tag = 'input window, operand 0']
    #allocation3 [shape = 's32[2]{0}', space=sflag, size = 0x8, scoped, tag = 'scoped memory for tpu_custom_call.1']
    #allocation4 [shape = 's32[2]{0}', space=sflag, size = 0x8, scoped, tag = 'scoped memory for tpu_custom_call.1']
    #allocation5 [shape = 'u8[8192]{0}', space=vmem, size = 0x2000, scoped, tag = 'output window, operand 0']
    %10 = vsyncpa [#allocation3], 0
    %s11 = scalar_lea.sflag [#allocation3], 1
    %12 = vsyncpa %s11, 0
    %13 = vsyncpa [#allocation4], 0
    %s14 = scalar_lea.sflag [#allocation4], 1
    %15 = vsyncpa %s14, 0
    loop: start=0, step=1, limit=4
    $region2: #{tpu_custom_call.1} parent=1 // loop_pre_header
      _
    $region3: #{tpu_custom_call.1} parent=1 // loop_header
      %s17 = sphi 0, %s21
      %p18 = scmp.ge.s32.totalorder %s17, 4
      %s24 = sphi 0, %s36
      %s25 = sphi 0, %s32
      %s26 = sphi 0, %s24
      %s27 = sphi 0, %s25
      %s28 = sphi 0, %s26
      %s29 = sphi 0, %s27
      %s41 = sphi 0, %s43
      %s44 = sphi 0, %s41
      %s45 = sphi 0, %s44
      %s61 = sphi 0, %s45
      %s65 = sphi 0, %s65
      %s67 = sphi 0, %s65
      %s68 = sphi 0, %s67
      %s82 = sphi 0, %s68
      %s86 = sphi 0, %s86
      %s88 = sphi 0, %s86
      %s89 = sphi 0, %s88
      %s103 = sphi 0, %s89
      %s107 = sphi 0, %s107
      %s109 = sphi 0, %s107
      %s110 = sphi 0, %s109
      %s124 = sphi 0, %s110
      %s128 = sphi 0, %s128
      %s130 = sphi 0, %s128
      %s131 = sphi 0, %s130
      %s145 = sphi 0, %s131
      %s153 = sphi 0, %s155
      %s156 = sphi 0, %s153
      %s157 = sphi 0, %s156
      %s173 = sphi 0, %s157
    $region4: #{tpu_custom_call.1} parent=1 // loop_header_branch
      %20 = sbr.rel (%p18) target = $region8
    $region5: #{tpu_custom_call.1} parent=1 // loop_body
      %s22 = ssub.s32 %s17, 1
      %s23 = ssub.s32 %s17, 2
      %s30 = sadd.s32 1, %s25
      %p31 = scmp.ge.s32.totalorder %s30, 1
      %s32 = scalar_select %p31, 0, %s30
      %s33 = sadd.s32 1, %s24
      %s34 = scalar_select %p31, %s33, %s24
      %p35 = scmp.ge.s32.totalorder %s34, 2
      %s36 = scalar_select %p35, 0, %s34
      %s37 = ssub.s32 %s24, %s36
      %s38 = ssub.s32 %s25, %s32
      %s39 = sor.u32 %s37, %s38
      %p40 = scmp.eq.s32.totalorder %s39, 0
      %s42 = sadd.s32 %s41, 1
      %s43 = scalar_select %p40, %s41, %s42
      %p46 = pneg %p40
      %p47 = scmp.eq.s32.totalorder %s17, 1
      %p48 = por %p46, %p47
      %p49 = scmp.ne.s32.totalorder %s41, %s44
      %p50 = scmp.eq.s32.totalorder %s17, 0
      %p51 = por %p49, %p50
      %p52 = scmp.ne.s32.totalorder %s41, %s44
      %p53 = scmp.eq.s32.totalorder %s22, 1
      %p54 = por %p52, %p53
      %p55 = scmp.ne.s32.totalorder %s44, %s45
      %p56 = scmp.eq.s32.totalorder %s22, 0
      %p57 = por %p55, %p56
      %p58 = scmp.ne.s32.totalorder %s44, %s45
      %p59 = scmp.eq.s32.totalorder %s23, 1
      %p60 = por %p58, %p59
      %p62 = scmp.ne.s32.totalorder %s45, %s61
      %p63 = scmp.eq.s32.totalorder %s23, 0
      %p64 = por %p62, %p63
      %s66 = sadd.s32 %s65, 1
      %p69 = scmp.eq.s32.totalorder %s17, 1
      %p70 = scmp.ne.s32.totalorder %s65, %s67
      %p71 = scmp.eq.s32.totalorder %s17, 0
      %p72 = por %p70, %p71
      %p73 = scmp.ne.s32.totalorder %s65, %s67
      %p74 = scmp.eq.s32.totalorder %s22, 1
      %p75 = por %p73, %p74
      %p76 = scmp.ne.s32.totalorder %s67, %s68
      %p77 = scmp.eq.s32.totalorder %s22, 0
      %p78 = por %p76, %p77
      %p79 = scmp.ne.s32.totalorder %s67, %s68
      %p80 = scmp.eq.s32.totalorder %s23, 1
      %p81 = por %p79, %p80
      %p83 = scmp.ne.s32.totalorder %s68, %s82
      %p84 = scmp.eq.s32.totalorder %s23, 0
      %p85 = por %p83, %p84
      %s87 = sadd.s32 %s86, 1
      %p90 = scmp.eq.s32.totalorder %s17, 1
      %p91 = scmp.ne.s32.totalorder %s86, %s88
      %p92 = scmp.eq.s32.totalorder %s17, 0
      %p93 = por %p91, %p92
      %p94 = scmp.ne.s32.totalorder %s86, %s88
      %p95 = scmp.eq.s32.totalorder %s22, 1
      %p96 = por %p94, %p95
      %p97 = scmp.ne.s32.totalorder %s88, %s89
      %p98 = scmp.eq.s32.totalorder %s22, 0
      %p99 = por %p97, %p98
      %p100 = scmp.ne.s32.totalorder %s88, %s89
      %p101 = scmp.eq.s32.totalorder %s23, 1
      %p102 = por %p100, %p101
      %p104 = scmp.ne.s32.totalorder %s89, %s103
      %p105 = scmp.eq.s32.totalorder %s23, 0
      %p106 = por %p104, %p105
      %s108 = sadd.s32 %s107, 1
      %p111 = scmp.eq.s32.totalorder %s17, 1
      %p112 = scmp.ne.s32.totalorder %s107, %s109
      %p113 = scmp.eq.s32.totalorder %s17, 0
      %p114 = por %p112, %p113
      %p115 = scmp.ne.s32.totalorder %s107, %s109
      %p116 = scmp.eq.s32.totalorder %s22, 1
      %p117 = por %p115, %p116
      %p118 = scmp.ne.s32.totalorder %s109, %s110
      %p119 = scmp.eq.s32.totalorder %s22, 0
      %p120 = por %p118, %p119
      %p121 = scmp.ne.s32.totalorder %s109, %s110
      %p122 = scmp.eq.s32.totalorder %s23, 1
      %p123 = por %p121, %p122
      %p125 = scmp.ne.s32.totalorder %s110, %s124
      %p126 = scmp.eq.s32.totalorder %s23, 0
      %p127 = por %p125, %p126
      %s129 = sadd.s32 %s128, 1
      %p132 = scmp.eq.s32.totalorder %s17, 1
      %p133 = scmp.ne.s32.totalorder %s128, %s130
      %p134 = scmp.eq.s32.totalorder %s17, 0
      %p135 = por %p133, %p134
      %p136 = scmp.ne.s32.totalorder %s128, %s130
      %p137 = scmp.eq.s32.totalorder %s22, 1
      %p138 = por %p136, %p137
      %p139 = scmp.ne.s32.totalorder %s130, %s131
      %p140 = scmp.eq.s32.totalorder %s22, 0
      %p141 = por %p139, %p140
      %p142 = scmp.ne.s32.totalorder %s130, %s131
      %p143 = scmp.eq.s32.totalorder %s23, 1
      %p144 = por %p142, %p143
      %p146 = scmp.ne.s32.totalorder %s131, %s145
      %p147 = scmp.eq.s32.totalorder %s23, 0
      %p148 = por %p146, %p147
      %s149 = ssub.s32 %s24, %s36
      %s150 = ssub.s32 %s25, %s32
      %s151 = sor.u32 %s149, %s150
      %p152 = scmp.eq.s32.totalorder %s151, 0
      %s154 = sadd.s32 %s153, 1
      %s155 = scalar_select %p152, %s153, %s154
      %p158 = pneg %p152
      %p159 = scmp.eq.s32.totalorder %s17, 1
      %p160 = por %p158, %p159
      %p161 = scmp.ne.s32.totalorder %s153, %s156
      %p162 = scmp.eq.s32.totalorder %s17, 0
      %p163 = por %p161, %p162
      %p164 = scmp.ne.s32.totalorder %s153, %s156
      %p165 = scmp.eq.s32.totalorder %s22, 1
      %p166 = por %p164, %p165
      %p167 = scmp.ne.s32.totalorder %s156, %s157
      %p168 = scmp.eq.s32.totalorder %s22, 0
      %p169 = por %p167, %p168
      %p170 = scmp.ne.s32.totalorder %s156, %s157
      %p171 = scmp.eq.s32.totalorder %s23, 1
      %p172 = por %p170, %p171
      %p174 = scmp.ne.s32.totalorder %s157, %s173
      %p175 = scmp.eq.s32.totalorder %s23, 0
      %p176 = por %p174, %p175
      %p177 = scmp.le.s32.totalorder 1, %s17
      %p178 = scmp.lt.s32.totalorder %s17, 3
      %p179 = pnand %p177, %p178
      %p180 = pneg %p179
      // Predicated region
      $region9: #{tpu_custom_call.1} parent=5 // pred_check
        _
      $region10: #{tpu_custom_call.1} parent=5 // pred_check_branch
        %182 = sbr.rel (%p179) target = $region12
      $region11: #{tpu_custom_call.1} parent=5 // pred_region
        %s183 = ssub.s32 %s17, 1
        // Predicated region
        $region13: #{tpu_custom_call.1} parent=11 // pred_check
          %p184 = pneg %p78
        $region14: #{tpu_custom_call.1} parent=11 // pred_check_branch
          %186 = sbr.rel (%p184) target = $region16
        $region15: #{tpu_custom_call.1} parent=11 // pred_region
          _
        $region16: #{tpu_custom_call.1} parent=11 // pred_fallthru
          _
        // Predicated region
        $region17: #{tpu_custom_call.1} parent=11 // pred_check
          %p187 = pneg %p99
        $region18: #{tpu_custom_call.1} parent=11 // pred_check_branch
          %189 = sbr.rel (%p187) target = $region20
        $region19: #{tpu_custom_call.1} parent=11 // pred_region
          _
        $region20: #{tpu_custom_call.1} parent=11 // pred_fallthru
          _
        // Predicated region
        $region21: #{tpu_custom_call.1} parent=11 // pred_check
          %p190 = pneg %p120
        $region22: #{tpu_custom_call.1} parent=11 // pred_check_branch
          %192 = sbr.rel (%p190) target = $region24
        $region23: #{tpu_custom_call.1} parent=11 // pred_region
          _
        $region24: #{tpu_custom_call.1} parent=11 // pred_fallthru
          _
        // Predicated region
        $region25: #{tpu_custom_call.1} parent=11 // pred_check
          %p193 = pneg %p141
        $region26: #{tpu_custom_call.1} parent=11 // pred_check_branch
          %195 = sbr.rel (%p193) target = $region28
        $region27: #{tpu_custom_call.1} parent=11 // pred_region
          _
        $region28: #{tpu_custom_call.1} parent=11 // pred_fallthru
          _
      $region12: #{tpu_custom_call.1} parent=5 // pred_fallthru
        _
      %p196 = scmp.lt.s32.totalorder %s17, 2
      // Predicated region
      $region29: #{tpu_custom_call.1} parent=5 // pred_check
        %p197 = pneg %p196
      $region30: #{tpu_custom_call.1} parent=5 // pred_check_branch
        %199 = sbr.rel (%p197) target = $region32
      $region31: #{tpu_custom_call.1} parent=5 // pred_region
        // Predicated region
        $region33: #{tpu_custom_call.1} parent=31 // pred_check
          %p200 = pneg %p51
        $region34: #{tpu_custom_call.1} parent=31 // pred_check_branch
          %202 = sbr.rel (%p200) target = $region36
        $region35: #{tpu_custom_call.1} parent=31 // pred_region
          %s203 = sand.u32 %s41, 1
          %s204 = scalar_lea.sflag [#allocation3], %s203
          %s205 = sand.u32 %s41, 1
          %s206 = smul.addr %s205, 8
          %s207 = scalar_lea.vmem [#allocation2], %s206
          %s208 = smul.u32 2, %s25
          %s210 = ssub.s32 128, 128
          %211 = vsyncadd %s204, %s210
          %s212 = smul.addr %s24, 2
          %s213 = sadd.s32 %s208, %s212
          %s214 = smul.addr %s213, 64
          %s215 = scalar_lea.hbm %s0, %s214
          %s217 = sshll.u32 %s207, 4
          %s218 = int_to_ptr.vmem [resolvable:$true] %s217
          %220 = dma.hbm_to_vmem [thread:$0]  %s215, 128, %s218, %s204
        $region36: #{tpu_custom_call.1} parent=31 // pred_fallthru
          _
      $region32: #{tpu_custom_call.1} parent=5 // pred_fallthru
        _
      %p221 = scmp.le.s32.totalorder 1, %s17
      %p222 = scmp.lt.s32.totalorder %s17, 3
      %p223 = pnand %p221, %p222
      %p224 = pneg %p223
      // Predicated region
      $region37: #{tpu_custom_call.1} parent=5 // pred_check
        _
      $region38: #{tpu_custom_call.1} parent=5 // pred_check_branch
        %226 = sbr.rel (%p223) target = $region40
      $region39: #{tpu_custom_call.1} parent=5 // pred_region
        %s227 = ssub.s32 %s17, 1
        %s228 = sand.u32 %s44, 1
        %s229 = scalar_lea.sflag [#allocation3], %s228
        %s230 = sand.u32 %s44, 1
        %s231 = smul.addr %s230, 8
        %s232 = scalar_lea.vmem [#allocation2], %s231
        // Predicated region
        $region41: #{tpu_custom_call.1} parent=39 // pred_check
          %p233 = pneg %p57
        $region42: #{tpu_custom_call.1} parent=39 // pred_check_branch
          %235 = sbr.rel (%p233) target = $region44
        $region43: #{tpu_custom_call.1} parent=39 // pred_region
          %236 = dma.done %s229, 128
        $region44: #{tpu_custom_call.1} parent=39 // pred_fallthru
          _
        %s237 = sand.u32 %s44, 1
        %s238 = scalar_lea.sflag [#allocation3], %s237
        %s239 = sand.u32 %s44, 1
        %s240 = smul.addr %s239, 8
        %s241 = scalar_lea.vmem [#allocation2], %s240
        %p242 = pneg %p57
        %p243 = pneg %p54
        %p244 = pneg %p78
        %p245 = pneg %p75
        %p246 = pneg %p99
        %p247 = pneg %p96
        %p248 = pneg %p120
        %p249 = pneg %p117
        %p250 = pneg %p141
        %p251 = pneg %p138
        %p252 = pneg %p169
        %p253 = pneg %p166
        %s254 = sand.u32 %s156, 1
        %s255 = scalar_lea.sflag [#allocation4], %s254
        %s256 = sand.u32 %s156, 1
        %s257 = smul.addr %s256, 8
        %s258 = scalar_lea.vmem [#allocation5], %s257
        %s259 = smul.u32 2, %s27
        %s260 = smul.u32 2, %s27
        %v261 = vld [vmem:[%s232] sm:$0xff]
        %v263 = vcombine.high %v261, %v261
        %vm265 = vcmask 1043456
        %v266 = vsel %vm265, %v261, 0.0
        %v267 = vrot.slane %v266, 4
        %v268 = vadd.f32 %v266, %v267
        %v269 = vrot.slane %v268, 2
        %v270 = vadd.f32 %v268, %v269
        %v271 = vrot.slane %v270, 1
        %v272 = vadd.f32 %v270, %v271
        %v273 = vsel %vm265, %v263, 0.0
        %v274 = vrot.slane %v273, 4
        %v275 = vadd.f32 %v273, %v274
        %v276 = vrot.slane %v275, 2
        %v277 = vadd.f32 %v275, %v276
        %v278 = vrot.slane %v277, 1
        %v279 = vadd.f32 %v277, %v278
        %v280 = vrcp.pop 4.0
        %v281 = vmul.f32 %v272, %v280
        %v282 = vmul.f32 %v279, %v280
        %v285 = vcombine.low %v281, %v282
        %v287 = vsub.f32 %v261, %v285
        %v288 = vmul.f32 %v287, %v287
        %v290 = vcombine.high %v288, %v288
        %v292 = vsel %vm265, %v288, 0.0
        %v293 = vrot.slane %v292, 4
        %v294 = vadd.f32 %v292, %v293
        %v295 = vrot.slane %v294, 2
        %v296 = vadd.f32 %v294, %v295
        %v297 = vrot.slane %v296, 1
        %v298 = vadd.f32 %v296, %v297
        %v299 = vsel %vm265, %v290, 0.0
        %v300 = vrot.slane %v299, 4
        %v301 = vadd.f32 %v299, %v300
        %v302 = vrot.slane %v301, 2
        %v303 = vadd.f32 %v301, %v302
        %v304 = vrot.slane %v303, 1
        %v305 = vadd.f32 %v303, %v304
        %v306 = vmul.f32 %v298, %v280
        %v307 = vmul.f32 %v305, %v280
        %v308 = vrsqrt.pop %v306
        %v309 = vmul.f32 %v306, %v308
        %vm310 = vcmp.eq.f32.partialorder %v306, inf
        %v311 = vsel %vm310, %v306, %v309
        %vm312 = vcmp.eq.f32.partialorder %v306, 0.0
        %v313 = vand.u32 %v306, 2147483648
        %v314 = vsel %vm312, %v313, %v311
        %v315 = vrsqrt.pop %v307
        %v316 = vmul.f32 %v307, %v315
        %vm317 = vcmp.eq.f32.partialorder %v307, inf
        %v318 = vsel %vm317, %v307, %v316
        %vm319 = vcmp.eq.f32.partialorder %v307, 0.0
        %v320 = vand.u32 %v307, 2147483648
        %v321 = vsel %vm319, %v320, %v318
        %v322 = vadd.f32 %v314, 1e-05
        %v323 = vadd.f32 %v321, 1e-05
        %v324 = vrcp.pop %v322
        %v325 = vrcp.pop %v323
        %v328 = vcombine.low %v324, %v325
        %v330 = vmul.f32 %v287, %v328
        %v331 = vld [vmem:[%s1] sm:$0xf]
        %333 = vset.pattern.permute.xlu0 0
        %334 = vperm.xlu0 %333, %v331
        %v335 = vpop.permute.xlu0 %334
        %v337 = vunpack.c.l.s4 839922192
        %v338 = vunpack.c.0.s8 %v337
        %v339 = vlaneseq
        %v340 = vshrl.u32 %v339, 7
        %v341 = vsub.s32 %v338, %v340
        %v342 = vrot.slane %v335, %v341
        %v344 = vmul.f32 %v330, %v342
        %v345 = vld [vmem:[%s2] sm:$0xf]
        %347 = vset.pattern.permute.xlu0 0
        %348 = vperm.xlu0 %347, %v345
        %v349 = vpop.permute.xlu0 %348
        %v351 = vunpack.c.l.s4 839922192
        %v352 = vunpack.c.0.s8 %v351
        %v353 = vlaneseq
        %v354 = vshrl.u32 %v353, 7
        %v355 = vsub.s32 %v352, %v354
        %v356 = vrot.slane %v349, %v355
        %v358 = vadd.f32 %v344, %v356
        %v359 = vld [vmem:[%s3] sm:$0xf]
        %v360 = vld [vmem:[%s4] sm:$0xf]
        %362 = vset.pattern.permute.xlu0 0
        %363 = vperm.xlu0 %362, %v360
        %v364 = vpop.permute.xlu0 %363
        %v367 = vcombine.high %v358, %v358
        %vm368 = vcmask 31744
        %v370 = vsel %vm368, %v359, 0
        %v372 = vsel %vm265, %v358, 0
        %v374 = vsel %vm265, %v367, 0
        %376 = vmatprep.subr.mxu0 0.0
        %377 = vmatpush1.msra.mxu0 0.0
        %378 = vmatprep.subr.mxu0 0.0
        %379 = vmatpush1.msra.mxu0 0.0
        %380 = vmatprep.subr.mxu0 0.0
        %381 = vmatpush1.msra.mxu0 0.0
        %382 = vmatprep.subr.mxu0 0.0
        %383 = vmatpush1.msra.mxu0 0.0
        %384 = vmatprep.subr.mxu0 0.0
        %385 = vmatpush1.msra.mxu0 0.0
        %386 = vmatprep.subr.mxu0 0.0
        %387 = vmatpush1.msra.mxu0 0.0
        %388 = vmatprep.subr.mxu0 0.0
        %389 = vmatpush1.msra.mxu0 0.0
        %390 = vmatprep.subr.mxu0 0.0
        %391 = vmatpush1.msra.mxu0 0.0
        %392 = vmatprep.subr.mxu0 0.0
        %393 = vmatpush1.msra.mxu0 0.0
        %394 = vmatprep.subr.mxu0 0.0
        %395 = vmatpush1.msra.mxu0 0.0
        %396 = vmatprep.subr.mxu0 0.0
        %397 = vmatpush1.msra.mxu0 0.0
        %398 = vmatprep.subr.mxu0 0.0
        %399 = vmatpush1.msra.mxu0 0.0
        %400 = vmatprep.subr.mxu0 0.0
        %401 = vmatpush1.msra.mxu0 0.0
        %402 = vmatprep.subr.mxu0 0.0
        %403 = vmatpush1.msra.mxu0 0.0
        %404 = vmatprep.subr.mxu0 0.0
        %405 = vmatpush1.msra.mxu0 0.0
        %406 = vmatprep.subr.mxu0 %v374
        %407 = vmatpush1.msra.mxu0 %v372
        %408 = vmatprep.subr.mxu0 0.0
        %409 = vmatpush2.msra.mxu0 0.0
        %410 = vmatprep.subr.mxu0 0.0
        %411 = vmatpush2.msra.mxu0 0.0
        %412 = vmatprep.subr.mxu0 0.0
        %413 = vmatpush2.msra.mxu0 0.0
        %414 = vmatprep.subr.mxu0 0.0
        %415 = vmatpush2.msra.mxu0 0.0
        %416 = vmatprep.subr.mxu0 0.0
        %417 = vmatpush2.msra.mxu0 0.0
        %418 = vmatprep.subr.mxu0 0.0
        %419 = vmatpush2.msra.mxu0 0.0
        %420 = vmatprep.subr.mxu0 0.0
        %421 = vmatpush2.msra.mxu0 0.0
        %422 = vmatprep.subr.mxu0 0.0
        %423 = vmatpush2.msra.mxu0 0.0
        %424 = vmatprep.subr.mxu0 0.0
        %425 = vmatpush2.msra.mxu0 0.0
        %426 = vmatprep.subr.mxu0 0.0
        %427 = vmatpush2.msra.mxu0 0.0
        %428 = vmatprep.subr.mxu0 0.0
        %429 = vmatpush2.msra.mxu0 0.0
        %430 = vmatprep.subr.mxu0 0.0
        %431 = vmatpush2.msra.mxu0 0.0
        %432 = vmatprep.subr.mxu0 0.0
        %433 = vmatpush2.msra.mxu0 0.0
        %434 = vmatprep.subr.mxu0 0.0
        %435 = vmatpush2.msra.mxu0 0.0
        %436 = vmatprep.subr.mxu0 0.0
        %437 = vmatpush2.msra.mxu0 0.0
        %438 = vmatprep.subr.mxu0 0.0
        %439 = vmatpush2.msra.mxu0 0.0
        %440 = vmatprep.mubr.f32.mxu0 0.0
        %441 = vmatmul.mubr.f32.gmra.mxu0 %v370
        %v442 = vpop.f32.mrf.mxu0
        %v443 = vadd.f32 %v364, %v442
        %v444 = vpop.f32.mrf.mxu0
        %v445 = vadd.f32 %v364, %v444
        %446 = vdwg.mxu0
        %v449 = vcombine.low %v443, %v445
        %451 = vst [vmem:[%s258] sm:$0xff] %v449
        %s452 = sand.u32 %s156, 1
        %s453 = scalar_lea.sflag [#allocation4], %s452
        %s454 = sand.u32 %s156, 1
        %s455 = smul.addr %s454, 8
        %s456 = scalar_lea.vmem [#allocation5], %s455
        // Predicated region
        $region45: #{tpu_custom_call.1} parent=39 // pred_check
          %p457 = pneg %p166
        $region46: #{tpu_custom_call.1} parent=39 // pred_check_branch
          %459 = sbr.rel (%p457) target = $region48
        $region47: #{tpu_custom_call.1} parent=39 // pred_region
          %s460 = smul.u32 2, %s27
          %s462 = ssub.s32 128, 128
          %463 = vsyncadd %s453, %s462
          %s464 = smul.addr %s26, 2
          %s465 = sadd.s32 %s460, %s464
          %s466 = smul.addr %s465, 64
          %s467 = scalar_lea.hbm %s5, %s466
          %s469 = sshll.u32 %s456, 4
          %s470 = int_to_ptr.vmem [resolvable:$true] %s469
          %472 = dma.vmem_to_hbm [thread:$0]  %s470, 128, %s467, %s453
        $region48: #{tpu_custom_call.1} parent=39 // pred_fallthru
          _
      $region40: #{tpu_custom_call.1} parent=5 // pred_fallthru
        _
      %p473 = scmp.le.s32.totalorder 2, %s17
      // Predicated region
      $region49: #{tpu_custom_call.1} parent=5 // pred_check
        %p474 = pneg %p473
      $region50: #{tpu_custom_call.1} parent=5 // pred_check_branch
        %476 = sbr.rel (%p474) target = $region52
      $region51: #{tpu_custom_call.1} parent=5 // pred_region
        %s477 = ssub.s32 %s17, 2
        // Predicated region
        $region53: #{tpu_custom_call.1} parent=51 // pred_check
          %p478 = pneg %p172
        $region54: #{tpu_custom_call.1} parent=51 // pred_check_branch
          %480 = sbr.rel (%p478) target = $region56
        $region55: #{tpu_custom_call.1} parent=51 // pred_region
          %s481 = sand.u32 %s157, 1
          %s482 = scalar_lea.sflag [#allocation4], %s481
          %s483 = sand.u32 %s157, 1
          %s484 = smul.addr %s483, 8
          %s485 = scalar_lea.vmem [#allocation5], %s484
          %486 = dma.done %s482, 128
        $region56: #{tpu_custom_call.1} parent=51 // pred_fallthru
          _
      $region52: #{tpu_custom_call.1} parent=5 // pred_fallthru
        _
    $region6: #{tpu_custom_call.1} parent=1 // loop_footer
      %s21 = sadd.s32 1, %s17
    $region7: #{tpu_custom_call.1} parent=1 // loop_footer_branch
      %16 = sbr.rel target = $region3
    $region8: #{tpu_custom_call.1} parent=1 // loop_exit
      _
    %487 = vsyncpa [#allocation3], 1
    %s488 = scalar_lea.sflag [#allocation3], 1
    %489 = vsyncpa %s488, 1
    %490 = vsyncpa [#allocation4], 1
    %s491 = scalar_lea.sflag [#allocation4], 1
    %492 = vsyncpa %s491, 1

</llo_original>
